<compile_context>
chip_gen: v7x
topology: tpu7x:2x2x1
jax: 0.10.0
libtpu: 0.0.40
codegen_flags: <defaults>
</compile_context>

<pallas_src>
import functools

import jax
import jax.numpy as jnp
from jax.experimental import pallas as pl
from jax.experimental.pallas import tpu as pltpu


def _layernorm_kernel(x_ref, w_ref, b_ref, o_ref, *, eps):
    # x_ref: (TILE_B, C, TILE_S)  -- channels on sublanes, spatial on lanes
    # w_ref / b_ref: (1, C, 1) f32, VMEM-resident across the whole grid
    x = x_ref[...].astype(jnp.float32)
    mu = jnp.mean(x, axis=1, keepdims=True)            # (TILE_B, 1, TILE_S)
    xc = x - mu
    var = jnp.mean(xc * xc, axis=1, keepdims=True)     # biased (unbiased=False)
    inv = jax.lax.rsqrt(var + eps)                     # EUP slot
    # Fused epilogue: reuse xc from the variance pass; single scale + shift.
    o_ref[...] = (xc * inv * w_ref[...] + b_ref[...]).astype(o_ref.dtype)


def _vmem_capacity_bytes():
    default = 128 * 1024 * 1024
    try:
        info = pltpu.get_tpu_info()
        cap = getattr(info, "vmem_capacity_bytes", None)
        return int(cap) if cap else default
    except Exception:
        return default


def layer_norm_module(x, weight, bias, *, eps=1e-5,
                      target_block_bytes=8 * 1024 * 1024):
    """Equivalent of LayerNorm(dim).forward for NCDHW input x: (b, c, d, h, w)."""
    b, c, d, h, w = x.shape
    s = d * h * w
    x3 = x.reshape(b, c, s)                            # pure metadata reshape

    itemsize = jnp.dtype(x.dtype).itemsize

    # --- Generation-aware VMEM budget ---------------------------------------
    vmem_cap = _vmem_capacity_bytes()                  # 64 MiB (v7x) / 128 MiB (v5e/v6e)
    vmem_limit = min(vmem_cap // 2, 64 * 1024 * 1024)  # 32 MiB on v7x, 64 MiB elsewhere

    # Per-element footprint: double-buffered input + output, plus f32 temps
    # (the f32 upcast / centered copy), so bf16 inputs are budgeted correctly.
    eff_bytes_per_elem = 4 * itemsize + 3 * 4
    max_block_elems = int(vmem_limit * 0.75) // eff_bytes_per_elem
    max_block_elems = min(max_block_elems, max(1, target_block_bytes // itemsize))

    # Guard: for very large C even a (1, C, 128) block blows the budget.
    min_block_elems = c * min(s, 128)
    if min_block_elems > max_block_elems:
        # TODO(synk): tile the channel axis with an in-kernel two-pass loop for
        # very large C; for now fall back to the minimal lane-dense block and
        # raise the VMEM limit to cover it.
        max_block_elems = min_block_elems
        vmem_limit = min(vmem_cap,
                         int(min_block_elems * eff_bytes_per_elem * 1.3) + (4 << 20))

    # --- Tile selection ------------------------------------------------------
    max_lanes = max(128, (max_block_elems // c) // 128 * 128)
    if s <= max_lanes:
        tile_s = s                                     # full extent (legal block)
        # Fold batch rows into the block so small-S shapes still do big DMAs.
        tile_b = max(1, min(b, max_block_elems // (c * s)))
        for t in range(tile_b, 0, -1):                 # prefer an even split of b
            if b % t == 0:
                tile_b = t
                break
    else:
        tile_b = 1
        tile_s = max_lanes
        t = max_lanes
        while t >= 128:                                # prefer a divisor of S
            if s % t == 0:
                tile_s = t
                break
            t -= 128

    grid = (pl.cdiv(b, tile_b), pl.cdiv(s, tile_s))

    # Weight/bias prepared once in the wrapper: (1, C, 1), f32, VMEM-resident.
    w3 = weight.reshape(1, c, 1).astype(jnp.float32)
    b3 = bias.reshape(1, c, 1).astype(jnp.float32)

    y3 = pl.pallas_call(
        functools.partial(_layernorm_kernel, eps=eps),
        out_shape=jax.ShapeDtypeStruct((b, c, s), x.dtype),
        grid_spec=pltpu.PrefetchScalarGridSpec(
            num_scalar_prefetch=0,
            grid=grid,
            in_specs=[
                pl.BlockSpec((tile_b, c, tile_s), lambda bi, si: (bi, 0, si)),
                pl.BlockSpec((1, c, 1), lambda bi, si: (0, 0, 0)),  # resident
                pl.BlockSpec((1, c, 1), lambda bi, si: (0, 0, 0)),  # resident
            ],
            out_specs=pl.BlockSpec((tile_b, c, tile_s), lambda bi, si: (bi, 0, si)),
        ),
        compiler_params=pltpu.CompilerParams(
            dimension_semantics=("parallel", "parallel"),
            vmem_limit_bytes=int(vmem_limit),
        ),
    )(x3, w3, b3)

    return y3.reshape(b, c, d, h, w)


if __name__ == "__main__":
    key = jax.random.PRNGKey(0)
    b, c, d, h, w = 2, 16, 4, 8, 8                    # S = d*h*w = 256
    x = jax.random.normal(key, (b, c, d, h, w), dtype=jnp.float32)

    # Deterministic parameter init matching WithBias_LayerNorm.__init__:
    weight = jnp.ones((c,), dtype=jnp.float32)
    bias = jnp.zeros((c,), dtype=jnp.float32)

    out = layer_norm_module(x, weight, bias)
    out = jax.block_until_ready(out)

    # Pure-JAX reference (channel-wise LN over the to_3d last axis,
    # unbiased=False, eps=1e-5).
    xt = jnp.transpose(x, (0, 2, 3, 4, 1))
    mu = jnp.mean(xt, axis=-1, keepdims=True)
    var = jnp.mean((xt - mu) ** 2, axis=-1, keepdims=True)
    ref = (xt - mu) / jnp.sqrt(var + 1e-5) * weight + bias
    ref = jnp.transpose(ref, (0, 4, 1, 2, 3))

    assert out.shape == x.shape
    assert jnp.max(jnp.abs(out - ref)) < 1e-5

    print("KERNEL_OK")
</pallas_src>

<mosaic_0001>
module attributes {stable_mosaic.version = 11 : i64} {
  func.func @_layernorm_kernel(%arg0: i32, %arg1: i32, %arg2: memref<2x16x256xf32, #tpu.memory_space<vmem>>, %arg3: memref<1x16x1xf32, #tpu.memory_space<vmem>>, %arg4: memref<1x16x1xf32, #tpu.memory_space<vmem>>, %arg5: memref<2x16x256xf32, #tpu.memory_space<vmem>>) attributes {dimension_semantics = [#tpu.dimension_semantics<parallel>, #tpu.dimension_semantics<parallel>], iteration_bounds = array<i64: 1, 1>, scalar_prefetch = 0 : i64, scratch_operands = 0 : i64, tpu.core_type = #tpu.core_type<tc>, window_params = [{transform_indices = @transform_0, window_bounds = array<i64: 2, 16, 256>}, {pipeline_mode = #tpu.pipeline_mode<synchronous>, transform_indices = @transform_1, window_bounds = array<i64: 1, 16, 1>}, {pipeline_mode = #tpu.pipeline_mode<synchronous>, transform_indices = @transform_2, window_bounds = array<i64: 1, 16, 1>}, {transform_indices = @transform_3, window_bounds = array<i64: 2, 16, 256>}]} {
    %c0 = arith.constant 0 : index
    %c0_0 = arith.constant 0 : index
    %c0_1 = arith.constant 0 : index
    %0 = vector.load %arg2[%c0, %c0_0, %c0_1] : memref<2x16x256xf32, #tpu.memory_space<vmem>>, vector<2x16x256xf32>
    %cst = arith.constant dense<0.000000e+00> : vector<2x256xf32>
    %1 = vector.multi_reduction <add>, %0, %cst [1] : vector<2x16x256xf32> to vector<2x256xf32>
    %2 = vector.shape_cast %1 : vector<2x256xf32> to vector<2x1x256xf32>
    %cst_2 = arith.constant 1.600000e+01 : f32
    %3 = vector.broadcast %cst_2 : f32 to vector<2x1x256xf32>
    %4 = arith.divf %2, %3 : vector<2x1x256xf32>
    %5 = vector.broadcast %4 : vector<2x1x256xf32> to vector<2x16x256xf32>
    %6 = arith.subf %0, %5 : vector<2x16x256xf32>
    %7 = arith.mulf %6, %6 : vector<2x16x256xf32>
    %cst_3 = arith.constant dense<0.000000e+00> : vector<2x256xf32>
    %8 = vector.multi_reduction <add>, %7, %cst_3 [1] : vector<2x16x256xf32> to vector<2x256xf32>
    %9 = vector.shape_cast %8 : vector<2x256xf32> to vector<2x1x256xf32>
    %cst_4 = arith.constant 1.600000e+01 : f32
    %10 = vector.broadcast %cst_4 : f32 to vector<2x1x256xf32>
    %11 = arith.divf %9, %10 : vector<2x1x256xf32>
    %cst_5 = arith.constant 9.99999974E-6 : f32
    %12 = vector.broadcast %cst_5 : f32 to vector<2x1x256xf32>
    %13 = arith.addf %11, %12 : vector<2x1x256xf32>
    %14 = math.rsqrt %13 : vector<2x1x256xf32>
    %15 = vector.broadcast %14 : vector<2x1x256xf32> to vector<2x16x256xf32>
    %16 = arith.mulf %6, %15 : vector<2x16x256xf32>
    %c0_6 = arith.constant 0 : index
    %c0_7 = arith.constant 0 : index
    %c0_8 = arith.constant 0 : index
    %17 = vector.load %arg3[%c0_6, %c0_7, %c0_8] : memref<1x16x1xf32, #tpu.memory_space<vmem>>, vector<1x16x1xf32>
    %18 = vector.broadcast %17 : vector<1x16x1xf32> to vector<2x16x256xf32>
    %19 = arith.mulf %16, %18 : vector<2x16x256xf32>
    %c0_9 = arith.constant 0 : index
    %c0_10 = arith.constant 0 : index
    %c0_11 = arith.constant 0 : index
    %20 = vector.load %arg4[%c0_9, %c0_10, %c0_11] : memref<1x16x1xf32, #tpu.memory_space<vmem>>, vector<1x16x1xf32>
    %21 = vector.broadcast %20 : vector<1x16x1xf32> to vector<2x16x256xf32>
    %22 = arith.addf %19, %21 : vector<2x16x256xf32>
    %c0_12 = arith.constant 0 : index
    %c0_13 = arith.constant 0 : index
    %c0_14 = arith.constant 0 : index
    %23 = vector.load %arg5[%c0_12, %c0_13, %c0_14] : memref<2x16x256xf32, #tpu.memory_space<vmem>>, vector<2x16x256xf32>
    tpu.vector_store %arg5[%c0_12, %c0_13, %c0_14], %22 {strides = array<i32>} : memref<2x16x256xf32, #tpu.memory_space<vmem>>, vector<2x16x256xf32>,
    return
  }
  func.func @transform_0(%arg0: i32, %arg1: i32) -> (i32, i32, i32) {
    %c0_i32 = arith.constant 0 : i32
    %c0_i32_0 = arith.constant 0 : i32
    return %arg0, %c0_i32, %arg1 : i32, i32, i32
  }
  func.func @transform_1(%arg0: i32, %arg1: i32) -> (i32, i32, i32) {
    %c0_i32 = arith.constant 0 : i32
    %c0_i32_0 = arith.constant 0 : i32
    %c0_i32_1 = arith.constant 0 : i32
    %c0_i32_2 = arith.constant 0 : i32
    return %c0_i32, %c0_i32_0, %c0_i32_1 : i32, i32, i32
  }
  func.func @transform_2(%arg0: i32, %arg1: i32) -> (i32, i32, i32) {
    %c0_i32 = arith.constant 0 : i32
    %c0_i32_0 = arith.constant 0 : i32
    %c0_i32_1 = arith.constant 0 : i32
    %c0_i32_2 = arith.constant 0 : i32
    return %c0_i32, %c0_i32_0, %c0_i32_1 : i32, i32, i32
  }
  func.func @transform_3(%arg0: i32, %arg1: i32) -> (i32, i32, i32) {
    %c0_i32 = arith.constant 0 : i32
    %c0_i32_0 = arith.constant 0 : i32
    return %arg0, %c0_i32, %arg1 : i32, i32, i32
  }
}

</mosaic_0001>

<llo_original>
// kernel: tpu_custom_call.1
$region0: #{tpu_custom_call.1}
  #allocation0 [shape = 'u32[]', space=smem, size = 0x4, offset = 0x4, fixed_abs, tag = 'smem constant byte address 0x4 - core index']
  #allocation1 [shape = 'u32[144,128]{1,0:T(1,128)}', space=vmem, size = 0x12000, scoped, tag = 'internal scratch']
  %s0 = inlined_call_operand.hbm [shape: f32[2,16,256], index: 0, kind: input, shape index: {}]
  %s1 = inlined_call_operand.hbm [shape: f32[1,16,1], index: 1, kind: input, shape index: {}]
  %s2 = inlined_call_operand.hbm [shape: f32[1,16,1], index: 2, kind: input, shape index: {}]
  %s3 = inlined_call_operand.hbm [shape: f32[2,16,256], index: 3, kind: output, shape index: {}]
  %s4 = sld [smem:[#allocation0]]
  $region34: #{tpu_custom_call.1} parent=0
    _
  %s6 = ssub.s32 1, %s4
  %s7 = scalar_select 0, %s6, %s4
  $region1: #{tpu_custom_call.1} parent=0
    #allocation2 [shape = 'u8[32768]{0}', space=vmem, size = 0x8000, scoped, tag = 'input window, operand 0, single buffered']
    #allocation3 [shape = 's32[1]{0}', space=sflag, size = 0x4, scoped, tag = 'scoped memory for tpu_custom_call.1']
    #allocation4 [shape = 's32[1]{0}', space=sflag, size = 0x4, scoped, tag = 'scoped memory for tpu_custom_call.1']
    #allocation5 [shape = 'u8[8192]{0}', space=vmem, size = 0x2000, scoped, tag = 'input window, operand 1, single buffered']
    #allocation6 [shape = 's32[1]{0}', space=sflag, size = 0x4, scoped, tag = 'scoped memory for tpu_custom_call.1']
    #allocation7 [shape = 'u8[8192]{0}', space=vmem, size = 0x2000, scoped, tag = 'input window, operand 2, single buffered']
    #allocation8 [shape = 'u8[32768]{0}', space=vmem, size = 0x8000, scoped, tag = 'output window, operand 0, single buffered']
    %8 = vsyncpa [#allocation3], 0
    %9 = vsyncpa [#allocation6], 0
    %10 = vsyncpa [#allocation4], 0
    // Predicated region
    $region2: #{tpu_custom_call.1} parent=1 // pred_check
      _
    $region3: #{tpu_custom_call.1} parent=1 // pred_check_branch
      %12 = sbr.rel (0) target = $region5
    $region4: #{tpu_custom_call.1} parent=1 // pred_region
      %s14 = ssub.s32 1024, 1024
      %15 = vsyncadd [#allocation3], %s14
      %s16 = sshll.u32 [#allocation2], 4
      %s17 = int_to_ptr.vmem [resolvable:$true] %s16
      %22 = dma.hbm_to_vmem [thread:$0]  %s0, 1024, %s17, [#allocation3], 256, 256, 16
    $region5: #{tpu_custom_call.1} parent=1 // pred_fallthru
      _
    // Predicated region
    $region6: #{tpu_custom_call.1} parent=1 // pred_check
      _
    $region7: #{tpu_custom_call.1} parent=1 // pred_check_branch
      %24 = sbr.rel (0) target = $region9
    $region8: #{tpu_custom_call.1} parent=1 // pred_region
      %s26 = ssub.s32 256, 256
      %27 = vsyncadd [#allocation6], %s26
      %s28 = sshll.u32 [#allocation5], 4
      %s29 = int_to_ptr.vmem [resolvable:$true] %s28
      %34 = dma.hbm_to_vmem [thread:$0]  %s1, 256, %s29, [#allocation6], 128, 128, 8
    $region9: #{tpu_custom_call.1} parent=1 // pred_fallthru
      _
    // Predicated region
    $region10: #{tpu_custom_call.1} parent=1 // pred_check
      _
    $region11: #{tpu_custom_call.1} parent=1 // pred_check_branch
      %36 = sbr.rel (0) target = $region13
    $region12: #{tpu_custom_call.1} parent=1 // pred_region
      %s38 = ssub.s32 256, 256
      %39 = vsyncadd [#allocation6], %s38
      %s40 = sshll.u32 [#allocation7], 4
      %s41 = int_to_ptr.vmem [resolvable:$true] %s40
      %46 = dma.hbm_to_vmem [thread:$0]  %s2, 256, %s41, [#allocation6], 128, 128, 8
    $region13: #{tpu_custom_call.1} parent=1 // pred_fallthru
      _
    // Predicated region
    $region14: #{tpu_custom_call.1} parent=1 // pred_check
      _
    $region15: #{tpu_custom_call.1} parent=1 // pred_check_branch
      %48 = sbr.rel (0) target = $region17
    $region16: #{tpu_custom_call.1} parent=1 // pred_region
      %49 = dma.done [#allocation3], 1024
    $region17: #{tpu_custom_call.1} parent=1 // pred_fallthru
      _
    // Predicated region
    $region18: #{tpu_custom_call.1} parent=1 // pred_check
      _
    $region19: #{tpu_custom_call.1} parent=1 // pred_check_branch
      %51 = sbr.rel (0) target = $region21
    $region20: #{tpu_custom_call.1} parent=1 // pred_region
      %52 = dma.done [#allocation6], 256
    $region21: #{tpu_custom_call.1} parent=1 // pred_fallthru
      _
    // Predicated region
    $region22: #{tpu_custom_call.1} parent=1 // pred_check
      _
    $region23: #{tpu_custom_call.1} parent=1 // pred_check_branch
      %54 = sbr.rel (0) target = $region25
    $region24: #{tpu_custom_call.1} parent=1 // pred_region
      %55 = dma.done [#allocation6], 256
    $region25: #{tpu_custom_call.1} parent=1 // pred_fallthru
      _
    %v56 = vld [vmem:[#allocation2] sm:$0xff]
    %v57 = vld [vmem:[#allocation2 + $0x8] sm:$0xff]
    %v58 = vld [vmem:[#allocation2 + $0x10] sm:$0xff]
    %v59 = vld [vmem:[#allocation2 + $0x18] sm:$0xff]
    %v60 = vld [vmem:[#allocation2 + $0x20] sm:$0xff]
    %v61 = vld [vmem:[#allocation2 + $0x28] sm:$0xff]
    %v62 = vld [vmem:[#allocation2 + $0x30] sm:$0xff]
    %v63 = vld [vmem:[#allocation2 + $0x38] sm:$0xff]
    %v64 = vadd.f32 %v56, %v58
    %v65 = vrot.slane %v64, 4
    %v66 = vadd.f32 %v64, %v65
    %v67 = vrot.slane %v66, 2
    %v68 = vadd.f32 %v66, %v67
    %v69 = vrot.slane %v68, 1
    %v70 = vadd.f32 %v68, %v69
    %v71 = vadd.f32 %v57, %v59
    %v72 = vrot.slane %v71, 4
    %v73 = vadd.f32 %v71, %v72
    %v74 = vrot.slane %v73, 2
    %v75 = vadd.f32 %v73, %v74
    %v76 = vrot.slane %v75, 1
    %v77 = vadd.f32 %v75, %v76
    %v78 = vadd.f32 %v60, %v62
    %v79 = vrot.slane %v78, 4
    %v80 = vadd.f32 %v78, %v79
    %v81 = vrot.slane %v80, 2
    %v82 = vadd.f32 %v80, %v81
    %v83 = vrot.slane %v82, 1
    %v84 = vadd.f32 %v82, %v83
    %v85 = vadd.f32 %v61, %v63
    %v86 = vrot.slane %v85, 4
    %v87 = vadd.f32 %v85, %v86
    %v88 = vrot.slane %v87, 2
    %v89 = vadd.f32 %v87, %v88
    %v90 = vrot.slane %v89, 1
    %v91 = vadd.f32 %v89, %v90
    %v92 = vrcp.pop 16.0
    %v93 = vmul.f32 %v70, %v92
    %v94 = vmul.f32 %v77, %v92
    %v95 = vmul.f32 %v84, %v92
    %v96 = vmul.f32 %v91, %v92
    %v97 = vsub.f32 %v56, %v93
    %v98 = vsub.f32 %v57, %v94
    %v99 = vsub.f32 %v58, %v93
    %v100 = vsub.f32 %v59, %v94
    %v101 = vsub.f32 %v60, %v95
    %v102 = vsub.f32 %v61, %v96
    %v103 = vsub.f32 %v62, %v95
    %v104 = vsub.f32 %v63, %v96
    %v105 = vmul.f32 %v97, %v97
    %v106 = vmul.f32 %v98, %v98
    %v107 = vmul.f32 %v99, %v99
    %v108 = vmul.f32 %v100, %v100
    %v109 = vmul.f32 %v101, %v101
    %v110 = vmul.f32 %v102, %v102
    %v111 = vmul.f32 %v103, %v103
    %v112 = vmul.f32 %v104, %v104
    %v113 = vadd.f32 %v105, %v107
    %v114 = vrot.slane %v113, 4
    %v115 = vadd.f32 %v113, %v114
    %v116 = vrot.slane %v115, 2
    %v117 = vadd.f32 %v115, %v116
    %v118 = vrot.slane %v117, 1
    %v119 = vadd.f32 %v117, %v118
    %v120 = vadd.f32 %v106, %v108
    %v121 = vrot.slane %v120, 4
    %v122 = vadd.f32 %v120, %v121
    %v123 = vrot.slane %v122, 2
    %v124 = vadd.f32 %v122, %v123
    %v125 = vrot.slane %v124, 1
    %v126 = vadd.f32 %v124, %v125
    %v127 = vadd.f32 %v109, %v111
    %v128 = vrot.slane %v127, 4
    %v129 = vadd.f32 %v127, %v128
    %v130 = vrot.slane %v129, 2
    %v131 = vadd.f32 %v129, %v130
    %v132 = vrot.slane %v131, 1
    %v133 = vadd.f32 %v131, %v132
    %v134 = vadd.f32 %v110, %v112
    %v135 = vrot.slane %v134, 4
    %v136 = vadd.f32 %v134, %v135
    %v137 = vrot.slane %v136, 2
    %v138 = vadd.f32 %v136, %v137
    %v139 = vrot.slane %v138, 1
    %v140 = vadd.f32 %v138, %v139
    %v141 = vmul.f32 %v119, %v92
    %v142 = vmul.f32 %v126, %v92
    %v143 = vmul.f32 %v133, %v92
    %v144 = vmul.f32 %v140, %v92
    %v145 = vadd.f32 %v141, 1e-05
    %v146 = vadd.f32 %v142, 1e-05
    %v147 = vadd.f32 %v143, 1e-05
    %v148 = vadd.f32 %v144, 1e-05
    %v149 = vrsqrt.pop %v145
    %v150 = vrsqrt.pop %v146
    %v151 = vrsqrt.pop %v147
    %v152 = vrsqrt.pop %v148
    %v153 = vmul.f32 %v97, %v149
    %v154 = vmul.f32 %v98, %v150
    %v155 = vmul.f32 %v99, %v149
    %v156 = vmul.f32 %v100, %v150
    %v157 = vmul.f32 %v101, %v151
    %v158 = vmul.f32 %v102, %v152
    %v159 = vmul.f32 %v103, %v151
    %v160 = vmul.f32 %v104, %v152
    %v161 = vld [vmem:[#allocation5] sm:$0xff]
    %v162 = vld [vmem:[#allocation5 + $0x8] sm:$0xff]
    %164 = vset.pattern.permute.xlu0 0
    %165 = vperm.xlu0 %164, %v161
    %v166 = vpop.permute.xlu0 %165
    %169 = vset.pattern.permute.xlu0 0
    %170 = vperm.xlu0 %169, %v162
    %v171 = vpop.permute.xlu0 %170
    %v173 = vmul.f32 %v153, %v166
    %v174 = vmul.f32 %v154, %v166
    %v175 = vmul.f32 %v155, %v171
    %v176 = vmul.f32 %v156, %v171
    %v177 = vmul.f32 %v157, %v166
    %v178 = vmul.f32 %v158, %v166
    %v179 = vmul.f32 %v159, %v171
    %v180 = vmul.f32 %v160, %v171
    %v181 = vld [vmem:[#allocation7] sm:$0xff]
    %v182 = vld [vmem:[#allocation7 + $0x8] sm:$0xff]
    %184 = vset.pattern.permute.xlu0 0
    %185 = vperm.xlu0 %184, %v181
    %v186 = vpop.permute.xlu0 %185
    %189 = vset.pattern.permute.xlu0 0
    %190 = vperm.xlu0 %189, %v182
    %v191 = vpop.permute.xlu0 %190
    %v193 = vadd.f32 %v173, %v186
    %v194 = vadd.f32 %v174, %v186
    %v195 = vadd.f32 %v175, %v191
    %v196 = vadd.f32 %v176, %v191
    %v197 = vadd.f32 %v177, %v186
    %v198 = vadd.f32 %v178, %v186
    %v199 = vadd.f32 %v179, %v191
    %v200 = vadd.f32 %v180, %v191
    %201 = vst [vmem:[#allocation8] sm:$0xff] %v193
    %202 = vst [vmem:[#allocation8 + $0x8] sm:$0xff] %v194
    %203 = vst [vmem:[#allocation8 + $0x10] sm:$0xff] %v195
    %204 = vst [vmem:[#allocation8 + $0x18] sm:$0xff] %v196
    %205 = vst [vmem:[#allocation8 + $0x20] sm:$0xff] %v197
    %206 = vst [vmem:[#allocation8 + $0x28] sm:$0xff] %v198
    %207 = vst [vmem:[#allocation8 + $0x30] sm:$0xff] %v199
    %208 = vst [vmem:[#allocation8 + $0x38] sm:$0xff] %v200
    // Predicated region
    $region26: #{tpu_custom_call.1} parent=1 // pred_check
      _
    $region27: #{tpu_custom_call.1} parent=1 // pred_check_branch
      %210 = sbr.rel (0) target = $region29
    $region28: #{tpu_custom_call.1} parent=1 // pred_region
      %s212 = ssub.s32 1024, 1024
      %213 = vsyncadd [#allocation4], %s212
      %s214 = sshll.u32 [#allocation8], 4
      %s215 = int_to_ptr.vmem [resolvable:$true] %s214
      %220 = dma.vmem_to_hbm [thread:$0]  %s215, 1024, %s3, [#allocation4], 256, 256, 16
    $region29: #{tpu_custom_call.1} parent=1 // pred_fallthru
      _
    // Predicated region
    $region30: #{tpu_custom_call.1} parent=1 // pred_check
      _
    $region31: #{tpu_custom_call.1} parent=1 // pred_check_branch
      %222 = sbr.rel (0) target = $region33
    $region32: #{tpu_custom_call.1} parent=1 // pred_region
      %223 = dma.done [#allocation4], 1024
    $region33: #{tpu_custom_call.1} parent=1 // pred_fallthru
      _
    %224 = vsyncpa [#allocation3], 1
    %225 = vsyncpa [#allocation6], 1
    %226 = vsyncpa [#allocation4], 1

</llo_original>
